<compile_context>
chip_gen: v7x
topology: tpu7x:2x2x1
jax: 0.10.0
libtpu: 0.0.40
codegen_flags: <defaults>
</compile_context>

<pallas_src>
import math

import jax
import jax.numpy as jnp
from jax.experimental import pallas as pl
from jax.experimental.pallas import tpu as pltpu

SPLIT_DIM = 1        # deterministic stand-in for `sample(dims, k=1)[0]`
SPLIT_SECTIONS = 3   # deterministic stand-in for `randint(1, min(MAX_BRANCH, C))`
_LANE = 128          # TPU lane width (last-dim tile granule)


def _split_sizes(total: int, section: int):
    """Same chunking rule as torch.split(x, split_size_or_sections=int)."""
    sizes = []
    off = 0
    while off < total:
        sizes.append(min(section, total - off))
        off += sizes[-1]
    return sizes


def _make_dma_split_kernel(offsets, sizes, axis, ndim):
    n_out = len(sizes)

    def kernel(x_hbm, *rest):
        out_refs = rest[:n_out]
        sem = rest[n_out]
        copies = []
        # Start every per-output DMA first (they overlap across DMA queues),
        # then wait on all of them.  `axis` is always outside the last two
        # (tiled) dims of the view, so each slice is a tile-aligned slab.
        for i, (o_ref, off, sz) in enumerate(zip(out_refs, offsets, sizes)):
            idx = [slice(None)] * ndim
            idx[axis] = slice(off, off + sz)   # static slice on HBM ref: free view
            cp = pltpu.make_async_copy(x_hbm.at[tuple(idx)], o_ref, sem.at[i])
            cp.start()
            copies.append(cp)
        for cp in copies:
            cp.wait()
        # Pallas tracks the DMA writes into the output refs; if outputs were
        # ever donated/dropped downstream, add has_side_effects=True.

    return kernel


def _dma_split(x_view, axis, sizes, offsets):
    """Pure-DMA split of `x_view` along `axis` (must be outside last two dims)."""
    ndim = x_view.ndim
    out_shapes = []
    for sz in sizes:
        shp = list(x_view.shape)
        shp[axis] = sz
        out_shapes.append(jax.ShapeDtypeStruct(tuple(shp), x_view.dtype))

    kernel = _make_dma_split_kernel(offsets, sizes, axis, ndim)

    return pl.pallas_call(
        kernel,
        out_shape=tuple(out_shapes),
        # Pure-DMA path: everything stays in HBM, no auto-tiling / VMEM staging.
        in_specs=[pl.BlockSpec(memory_space=pl.ANY)],
        out_specs=tuple(pl.BlockSpec(memory_space=pl.ANY) for _ in out_shapes),
        scratch_shapes=[pltpu.SemaphoreType.DMA((len(sizes),))],
    )(x_view)


def pallas_split(x, sections=SPLIT_SECTIONS, dim=SPLIT_DIM):
    """Equivalent of torch.split(x, split_size_or_sections=sections, dim=dim)."""
    ndim = x.ndim
    sizes = _split_sizes(x.shape[dim], sections)
    offsets = [sum(sizes[:i]) for i in range(len(sizes))]

    trailing = int(math.prod(x.shape[dim + 1:])) if dim + 1 < ndim else 1

    if dim + 1 < ndim and trailing % _LANE == 0:
        # --- Main, lane-dense path -------------------------------------------
        # Collapse everything after the split axis into (F//128, 128) so the
        # HBM layout has no lane padding and the split axis is outside the two
        # tiled minor dims (tile-aligned slab DMA per section).
        lead = x.shape[: dim + 1]
        x_view = x.reshape(lead + (trailing // _LANE, _LANE))
        outs_view = _dma_split(x_view, dim, sizes, offsets)
        outs = []
        for o, sz in zip(outs_view, sizes):
            shp = list(x.shape)
            shp[dim] = sz
            outs.append(o.reshape(tuple(shp)))
        return tuple(outs)

    # --- Fallback path --------------------------------------------------------
    # Split axis is the lane axis, or the trailing extent is not lane-dense
    # (so the split axis would become the sublane axis with possibly unaligned
    # offsets).  Transpose so the split axis is majormost, run the same
    # slab-DMA kernel along axis 0 (always tile-aligned), transpose back.
    xm = jnp.moveaxis(x, dim, 0)
    s = x.shape[dim]
    rest = xm.shape[1:]
    flat = int(math.prod(rest)) if rest else 1
    if flat % _LANE == 0 and flat >= _LANE:
        view_shape = (s, flat // _LANE, _LANE)   # lane-dense
    else:
        view_shape = (s, 1, flat)                # still slab-aligned along axis 0
    x_view = xm.reshape(view_shape)
    outs_view = _dma_split(x_view, 0, sizes, offsets)
    outs = []
    for o, sz in zip(outs_view, sizes):
        om = o.reshape((sz,) + tuple(rest))
        outs.append(jnp.moveaxis(om, 0, dim))
    return tuple(outs)


def _check(x, outs, sections, dim):
    sizes = _split_sizes(x.shape[dim], sections)
    assert len(outs) == len(sizes)
    off = 0
    for o, sz in zip(outs, sizes):
        ref = jax.lax.slice_in_dim(x, off, off + sz, axis=dim)
        assert o.shape == ref.shape and o.dtype == ref.dtype
        assert jnp.array_equal(o, ref), "mismatch vs reference split"
        off += sz


if __name__ == "__main__":
    key = jax.random.PRNGKey(0)
    x = jax.random.normal(key, (2, 4, 16, 16), dtype=jnp.float32)  # NCHW

    # Main path: split over channels (dim=1, sections=3) -> lane-dense slab DMA.
    outs = pallas_split(x, sections=SPLIT_SECTIONS, dim=SPLIT_DIM)
    outs = jax.block_until_ready(outs)
    _check(x, outs, SPLIT_SECTIONS, SPLIT_DIM)

    # Fallback path: split over the last (lane) axis -> transpose-to-major DMA.
    outs_w = pallas_split(x, sections=6, dim=3)
    outs_w = jax.block_until_ready(outs_w)
    _check(x, outs_w, 6, 3)

    # TODO(synk): the PyTorch module's random choice of (dim, sections) and the
    # `.LAYOUT` tag on outputs have no runtime equivalent here; (dim, sections)
    # are fixed deterministically above.
    print("KERNEL_OK")
</pallas_src>

<mosaic_0001>
module attributes {stable_mosaic.version = 11 : i64} {
  func.func @kernel(%arg0: memref<2x4x2x128xf32, #tpu.memory_space<any>>, %arg1: memref<2x3x2x128xf32, #tpu.memory_space<any>>, %arg2: memref<2x1x2x128xf32, #tpu.memory_space<any>>, %arg3: memref<2x!tpu.dma_semaphore, #tpu.memory_space<semaphore_mem>>) attributes {dimension_semantics = [], scalar_prefetch = 0 : i64, scratch_operands = 1 : i64, tpu.core_type = #tpu.core_type<tc>} {
    %c0_i32 = arith.constant 0 : i32
    %c0_i32_0 = arith.constant 0 : i32
    %c0_i32_1 = arith.constant 0 : i32
    %c0_i32_2 = arith.constant 0 : i32
    %c0_i32_3 = arith.constant 0 : i32
    %0 = tpu.memref_slice %arg0[%c0_i32_0, %c0_i32_1, %c0_i32_2, %c0_i32_3] : memref<2x4x2x128xf32, #tpu.memory_space<any>> -> memref<2x3x2x128xf32, #tpu.memory_space<any>>
    %1 = tpu.memref_slice %arg3[%c0_i32] : memref<2x!tpu.dma_semaphore, #tpu.memory_space<semaphore_mem>> -> memref<1x!tpu.dma_semaphore, #tpu.memory_space<semaphore_mem>>
    %2 = tpu.memref_squeeze %1 : memref<1x!tpu.dma_semaphore, #tpu.memory_space<semaphore_mem>> -> memref<!tpu.dma_semaphore, #tpu.memory_space<semaphore_mem>>
    tpu.enqueue_dma source(%0 : memref<2x3x2x128xf32, #tpu.memory_space<any>>) target(%arg1 : memref<2x3x2x128xf32, #tpu.memory_space<any>>) target_semaphore(%2 : memref<!tpu.dma_semaphore, #tpu.memory_space<semaphore_mem>>)
    %c1_i32 = arith.constant 1 : i32
    %c0_i32_4 = arith.constant 0 : i32
    %c3_i32 = arith.constant 3 : i32
    %c0_i32_5 = arith.constant 0 : i32
    %c0_i32_6 = arith.constant 0 : i32
    %3 = tpu.memref_slice %arg0[%c0_i32_4, %c3_i32, %c0_i32_5, %c0_i32_6] : memref<2x4x2x128xf32, #tpu.memory_space<any>> -> memref<2x1x2x128xf32, #tpu.memory_space<any>>
    %4 = tpu.memref_slice %arg3[%c1_i32] : memref<2x!tpu.dma_semaphore, #tpu.memory_space<semaphore_mem>> -> memref<1x!tpu.dma_semaphore, #tpu.memory_space<semaphore_mem>>
    %5 = tpu.memref_squeeze %4 : memref<1x!tpu.dma_semaphore, #tpu.memory_space<semaphore_mem>> -> memref<!tpu.dma_semaphore, #tpu.memory_space<semaphore_mem>>
    tpu.enqueue_dma source(%3 : memref<2x1x2x128xf32, #tpu.memory_space<any>>) target(%arg2 : memref<2x1x2x128xf32, #tpu.memory_space<any>>) target_semaphore(%5 : memref<!tpu.dma_semaphore, #tpu.memory_space<semaphore_mem>>)
    %c0_i32_7 = arith.constant 0 : i32
    %c0_i32_8 = arith.constant 0 : i32
    %c0_i32_9 = arith.constant 0 : i32
    %c0_i32_10 = arith.constant 0 : i32
    %c0_i32_11 = arith.constant 0 : i32
    %6 = tpu.memref_slice %arg0[%c0_i32_8, %c0_i32_9, %c0_i32_10, %c0_i32_11] : memref<2x4x2x128xf32, #tpu.memory_space<any>> -> memref<2x3x2x128xf32, #tpu.memory_space<any>>
    %7 = tpu.memref_slice %arg3[%c0_i32_7] : memref<2x!tpu.dma_semaphore, #tpu.memory_space<semaphore_mem>> -> memref<1x!tpu.dma_semaphore, #tpu.memory_space<semaphore_mem>>
    %8 = tpu.memref_squeeze %7 : memref<1x!tpu.dma_semaphore, #tpu.memory_space<semaphore_mem>> -> memref<!tpu.dma_semaphore, #tpu.memory_space<semaphore_mem>>
    tpu.wait_dma2 semaphore(%8 : memref<!tpu.dma_semaphore, #tpu.memory_space<semaphore_mem>>) src(%6 : memref<2x3x2x128xf32, #tpu.memory_space<any>>) dst(%arg1 : memref<2x3x2x128xf32, #tpu.memory_space<any>>)
    %c1_i32_12 = arith.constant 1 : i32
    %c0_i32_13 = arith.constant 0 : i32
    %c3_i32_14 = arith.constant 3 : i32
    %c0_i32_15 = arith.constant 0 : i32
    %c0_i32_16 = arith.constant 0 : i32
    %9 = tpu.memref_slice %arg0[%c0_i32_13, %c3_i32_14, %c0_i32_15, %c0_i32_16] : memref<2x4x2x128xf32, #tpu.memory_space<any>> -> memref<2x1x2x128xf32, #tpu.memory_space<any>>
    %10 = tpu.memref_slice %arg3[%c1_i32_12] : memref<2x!tpu.dma_semaphore, #tpu.memory_space<semaphore_mem>> -> memref<1x!tpu.dma_semaphore, #tpu.memory_space<semaphore_mem>>
    %11 = tpu.memref_squeeze %10 : memref<1x!tpu.dma_semaphore, #tpu.memory_space<semaphore_mem>> -> memref<!tpu.dma_semaphore, #tpu.memory_space<semaphore_mem>>
    tpu.wait_dma2 semaphore(%11 : memref<!tpu.dma_semaphore, #tpu.memory_space<semaphore_mem>>) src(%9 : memref<2x1x2x128xf32, #tpu.memory_space<any>>) dst(%arg2 : memref<2x1x2x128xf32, #tpu.memory_space<any>>)
    return
  }
}

</mosaic_0001>

<llo_original>
// kernel: tpu_custom_call.1
$region0: #{tpu_custom_call.1}
  #allocation0 [shape = 'u32[]', space=smem, size = 0x4, offset = 0x4, fixed_abs, tag = 'smem constant byte address 0x4 - core index']
  #allocation1 [shape = 'u32[144,128]{1,0:T(1,128)}', space=vmem, size = 0x12000, scoped, tag = 'internal scratch']
  #allocation2 [shape = 's32[2]{0}', space=sflag, size = 0x8, scoped, tag = 'scratch operand']
  #allocation3 [shape = 's32[]', space=sflag, size = 0x4, offset = 0, fixed_abs, tag = 'sflag constant byte address 0x0 - dummy sync flag']
  #allocation5 [shape = 's32[]', space=sflag, size = 0x4, offset = 0, fixed_abs, tag = 'sflag constant byte address 0x0 - dummy sync flag']
  %s0 = inlined_call_operand.hbm [shape: f32[2,4,2,128], index: 0, kind: input, shape index: {}]
  %s1 = inlined_call_operand.hbm [shape: f32[2,3,2,128], index: 1, kind: output, shape index: {0}]
  %s2 = inlined_call_operand.hbm [shape: f32[2,1,2,128], index: 2, kind: output, shape index: {1}]
  %3 = xla_tuple %s1, %s2
  %s4 = sld [smem:[#allocation0]]
  $region2: #{tpu_custom_call.1} parent=0
    _
  %s6 = ssub.s32 1, %s4
  %s7 = scalar_select 0, %s6, %s4
  $region1: #{tpu_custom_call.1} parent=0
    #allocation4 [shape = 'u32[3]{0}', space=smem, size = 0xc, scoped, tag = 'DMA stride descriptor']
    #allocation6 [shape = 'u32[3]{0}', space=smem, size = 0xc, scoped, tag = 'DMA stride descriptor']
    %s9 = sshll.u32 1, 14
    %s10 = sxor.u32 4294967295, %s9
    %s13 = sshll.u32 3, 24
    %s14 = sxor.u32 4294967295, %s13
    %s15 = sand.u32 0, %s14
    %s17 = sor.u32 %s15, 0
    %20 = sst [smem:[#allocation4]] 128
    %s21 = scalar_lea.smem [#allocation4], 1
    %22 = sst [smem:[%s21]] 96
    %s23 = scalar_lea.smem [#allocation4], 2
    %24 = sst [smem:[%s23]] 6
    %26 = dma.general %s0, 192, %s1, [#allocation2], [#allocation3], [#allocation4], %s17, 0
    %s27 = scalar_lea.hbm %s0, 96
    %s28 = scalar_lea.sflag [#allocation2], 1
    %s30 = sshll.u32 1, 14
    %s31 = sxor.u32 4294967295, %s30
    %s34 = sshll.u32 3, 24
    %s35 = sxor.u32 4294967295, %s34
    %s36 = sand.u32 0, %s35
    %s38 = sor.u32 %s36, 0
    %41 = sst [smem:[#allocation6]] 128
    %s42 = scalar_lea.smem [#allocation6], 1
    %43 = sst [smem:[%s42]] 32
    %s44 = scalar_lea.smem [#allocation6], 2
    %45 = sst [smem:[%s44]] 2
    %47 = dma.general %s27, 64, %s2, %s28, [#allocation5], [#allocation6], %s38, 0
    %s48 = smul.u32 2, 3
    %s49 = smul.u32 %s48, 2
    %s50 = smul.u32 %s49, 1
    %s51 = sshll.u32 %s50, 4
    %52 = dma.done [#allocation2], %s51
    %s53 = smul.u32 2, 1
    %s54 = smul.u32 %s53, 2
    %s55 = smul.u32 %s54, 1
    %s56 = sshll.u32 %s55, 4
    %57 = dma.done %s28, %s56
  %58 = vsyncmov [#allocation2]
  %s59 = vpop.sfrf %58
  %p60 = scmp.eq.s32.totalorder %s59, 0
  %p61 = pneg %p60
  %63 = shalt.err (%p61)
  %s64 = scalar_lea.sflag [#allocation2], 1
  %65 = vsyncmov %s64
  %s66 = vpop.sfrf %65
  %p67 = scmp.eq.s32.totalorder %s66, 0
  %p68 = pneg %p67
  %70 = shalt.err (%p68)

</llo_original>
